<compile_context>
chip_gen: v5e
topology: v5e:2x2
jax: 0.10.0
libtpu: 0.0.40
codegen_flags: <defaults>
</compile_context>

<pallas_src>
import numpy as np
import jax
import jax.numpy as jnp
from jax.experimental import pallas as pl
from jax.experimental.pallas import tpu as pltpu


ORTHOGONAL_INIT_VALUES_PI = 0.01  # gain used for policy-style ('pi') heads

_SUBLANE = 8  # TPU sublane width -> batch-tile alignment


def _round_up(x: int, m: int) -> int:
    return ((x + m - 1) // m) * m


def _orthogonal(shape, gain, seed=0):
    """Deterministic orthogonal init (same semantics as torch.nn.init.orthogonal_)."""
    rng = np.random.RandomState(seed)
    rows, cols = shape
    flat = rng.normal(size=(rows, cols)).astype(np.float32)
    if rows < cols:
        flat = flat.T
    q, r = np.linalg.qr(flat)
    d = np.diag(r)
    # robust sign fix (avoid zeroing a column if a diagonal entry is exactly 0)
    q = q * np.where(d >= 0.0, 1.0, -1.0)
    if rows < cols:
        q = q.T
    return (gain * q[:rows, :cols]).astype(np.float32)


def interest_kernel(x_ref, w_ref, b_ref, o_ref):
    # x_ref: [TB, in_size], w_ref: [in_size, n] (resident),
    # b_ref: [1, n] (resident), o_ref: [TB, n] (narrow output, no padding).
    z = jnp.dot(x_ref[...], w_ref[...], preferred_element_type=jnp.float32)
    z = z + b_ref[...].astype(jnp.float32)   # broadcast bias over batch rows
    o_ref[...] = jax.nn.sigmoid(z).astype(o_ref.dtype)


def interest_head(x, w_t, b, *, block_b: int = 4096):
    """sigmoid(x @ w_t + b).

    x:   [B, in_size]
    w_t: [in_size, n]   (pre-transposed torch Linear weight)
    b:   [1, n]
    returns [B, n] in x.dtype (math in f32).
    """
    B, in_size = x.shape
    n = w_t.shape[1]

    # ---- batch tiling: sublane-aligned tile, no padding of B ----------------
    TB = min(block_b, _round_up(B, _SUBLANE))
    # Keep >=2 grid steps when there is enough work to split, so the "parallel"
    # batch axis can shard across the two TensorCores on v7x (one extra ~0.35us
    # step is noise on the single-core v5e/v6e).
    if B >= 2 * _SUBLANE and pl.cdiv(B, TB) < 2:
        TB = _round_up(pl.cdiv(B, 2), _SUBLANE)
    grid = (pl.cdiv(B, TB),)

    x_bytes = int(np.dtype(x.dtype).itemsize)
    w_bytes = int(np.dtype(w_t.dtype).itemsize)

    out = pl.pallas_call(
        interest_kernel,
        out_shape=jax.ShapeDtypeStruct((B, n), x.dtype),
        grid=grid,
        in_specs=[
            pl.BlockSpec((TB, in_size), lambda i: (i, 0)),   # x: tiled over batch
            pl.BlockSpec((in_size, n), lambda i: (0, 0)),    # weight: resident
            pl.BlockSpec((1, n), lambda i: (0, 0)),          # bias: resident
        ],
        out_specs=pl.BlockSpec((TB, n), lambda i: (i, 0)),   # narrow, unpadded
        compiler_params=pltpu.CompilerParams(
            # batch axis is independent -> megacore split on v7x, no-op elsewhere
            dimension_semantics=("parallel",),
        ),
        cost_estimate=pl.CostEstimate(
            flops=2 * B * in_size * n + B * n,
            transcendentals=B * n,                 # exp inside sigmoid
            bytes_accessed=(B * in_size * x_bytes + B * n * x_bytes
                            + in_size * n * w_bytes + n * w_bytes),
        ),
    )(x, w_t, b)

    return out


if __name__ == "__main__":
    # Small shapes consistent with the module: in_size=32 hidden, n=8 interests, batch=2.
    B, in_size, n = 2, 32, 8

    # Deterministic parameter init (orthogonal weight, zero bias), as in layer_init.
    W = _orthogonal((n, in_size), gain=ORTHOGONAL_INIT_VALUES_PI, seed=0)  # torch weight shape
    w_t = jnp.asarray(W.T)                     # [in_size, n], pre-transposed for the kernel
    b = jnp.zeros((1, n), dtype=jnp.float32)

    key = jax.random.PRNGKey(0)
    x = jax.random.normal(key, (B, in_size), dtype=jnp.float32)

    out = jax.block_until_ready(interest_head(x, w_t, b))
    ref = jax.nn.sigmoid(x @ w_t + b)
    assert out.shape == (B, n)
    np.testing.assert_allclose(np.asarray(out), np.asarray(ref), rtol=1e-5, atol=1e-5)

    # Larger batches: exercise the multi-tile grid, the forced >=2-tile split,
    # and a ragged (non-multiple-of-tile, non-multiple-of-8) last block.
    for B_big, bb in ((1040, 4096), (1037, 512)):
        x_big = jax.random.normal(jax.random.PRNGKey(1), (B_big, in_size), dtype=jnp.float32)
        out_big = jax.block_until_ready(interest_head(x_big, w_t, b, block_b=bb))
        ref_big = jax.nn.sigmoid(x_big @ w_t + b)
        assert out_big.shape == (B_big, n)
        np.testing.assert_allclose(np.asarray(out_big), np.asarray(ref_big),
                                   rtol=1e-5, atol=1e-5)

    print("KERNEL_OK")
</pallas_src>

<mosaic_0001>
module attributes {stable_mosaic.version = 11 : i64} {
  func.func @interest_kernel(%arg0: i32, %arg1: memref<8x32xf32, #tpu.memory_space<vmem>>, %arg2: memref<32x8xf32, #tpu.memory_space<vmem>>, %arg3: memref<1x8xf32, #tpu.memory_space<vmem>>, %arg4: memref<8x8xf32, #tpu.memory_space<vmem>>) attributes {dimension_semantics = [#tpu.dimension_semantics<parallel>], iteration_bounds = array<i64: 1>, scalar_prefetch = 0 : i64, scratch_operands = 0 : i64, tpu.core_type = #tpu.core_type<tc>, window_params = [{transform_indices = @transform_0, window_bounds = array<i64: 8, 32>}, {pipeline_mode = #tpu.pipeline_mode<synchronous>, transform_indices = @transform_1, window_bounds = array<i64: 32, 8>}, {pipeline_mode = #tpu.pipeline_mode<synchronous>, transform_indices = @transform_2, window_bounds = array<i64: 1, 8>}, {transform_indices = @transform_3, window_bounds = array<i64: 8, 8>}]} {
    %c0 = arith.constant 0 : index
    %c0_0 = arith.constant 0 : index
    %0 = vector.load %arg1[%c0, %c0_0] : memref<8x32xf32, #tpu.memory_space<vmem>>, vector<8x32xf32>
    %c0_1 = arith.constant 0 : index
    %c0_2 = arith.constant 0 : index
    %1 = vector.load %arg2[%c0_1, %c0_2] : memref<32x8xf32, #tpu.memory_space<vmem>>, vector<32x8xf32>
    %cst = arith.constant dense<0.000000e+00> : vector<8x8xf32>
    %2 = tpu.matmul %0, %1, %cst {dimension_numbers = #tpu.dot_dimension_numbers<[1], [0], [0], [1], [0, 0, 1, 1], [], []>} : vector<8x32xf32>, vector<32x8xf32>, vector<8x8xf32> -> vector<8x8xf32>
    %c0_3 = arith.constant 0 : index
    %c0_4 = arith.constant 0 : index
    %3 = vector.load %arg3[%c0_3, %c0_4] : memref<1x8xf32, #tpu.memory_space<vmem>>, vector<1x8xf32>
    %4 = vector.broadcast %3 : vector<1x8xf32> to vector<8x8xf32>
    %5 = arith.addf %2, %4 : vector<8x8xf32>
    %6 = arith.negf %5 : vector<8x8xf32>
    %7 = math.exp %6 : vector<8x8xf32>
    %cst_5 = arith.constant 1.000000e+00 : f32
    %8 = vector.broadcast %cst_5 : f32 to vector<8x8xf32>
    %9 = arith.addf %8, %7 : vector<8x8xf32>
    %10 = arith.divf %8, %9 : vector<8x8xf32>
    %c0_6 = arith.constant 0 : index
    %c0_7 = arith.constant 0 : index
    %11 = vector.load %arg4[%c0_6, %c0_7] : memref<8x8xf32, #tpu.memory_space<vmem>>, vector<8x8xf32>
    tpu.vector_store %arg4[%c0_6, %c0_7], %10 {strides = array<i32>} : memref<8x8xf32, #tpu.memory_space<vmem>>, vector<8x8xf32>,
    return
  }
  func.func @transform_0(%arg0: i32) -> (i32, i32) {
    %c0_i32 = arith.constant 0 : i32
    %c0_i32_0 = arith.constant 0 : i32
    return %arg0, %c0_i32 : i32, i32
  }
  func.func @transform_1(%arg0: i32) -> (i32, i32) {
    %c0_i32 = arith.constant 0 : i32
    %c0_i32_0 = arith.constant 0 : i32
    %c0_i32_1 = arith.constant 0 : i32
    return %c0_i32, %c0_i32_0 : i32, i32
  }
  func.func @transform_2(%arg0: i32) -> (i32, i32) {
    %c0_i32 = arith.constant 0 : i32
    %c0_i32_0 = arith.constant 0 : i32
    %c0_i32_1 = arith.constant 0 : i32
    return %c0_i32, %c0_i32_0 : i32, i32
  }
  func.func @transform_3(%arg0: i32) -> (i32, i32) {
    %c0_i32 = arith.constant 0 : i32
    %c0_i32_0 = arith.constant 0 : i32
    return %arg0, %c0_i32 : i32, i32
  }
}

</mosaic_0001>

<llo_original>
// kernel: tpu_custom_call.1
$region0: #{tpu_custom_call.1}
  #allocation0 [shape = 'u32[]', space=smem, size = 0x4, offset = 0x4, fixed_abs, tag = 'smem constant byte address 0x4 - core index']
  #allocation1 [shape = 'u32[72,128]{1,0:T(1,128)}', space=vmem, size = 0x9000, scoped, tag = 'internal scratch']
  %s0 = inlined_call_operand.vmem [shape: f32[2,32], index: 0, kind: input, shape index: {}]
  %s1 = inlined_call_operand.vmem [shape: f32[32,8], index: 1, kind: input, shape index: {}]
  %s2 = inlined_call_operand.vmem [shape: f32[1,8], index: 2, kind: input, shape index: {}]
  %s3 = inlined_call_operand.hbm [shape: f32[2,8], index: 3, kind: output, shape index: {}]
  %s4 = sld [smem:[#allocation0]]
  $region22: #{tpu_custom_call.1} parent=0
    _
  %s6 = ssub.s32 1, %s4
  %s7 = scalar_select 0, %s6, %s4
  $region1: #{tpu_custom_call.1} parent=0
    #allocation2 [shape = 'u8[4096]{0}', space=vmem, size = 0x1000, scoped, tag = 'output window, operand 0, single buffered']
    #allocation3 [shape = 's32[1]{0}', space=sflag, size = 0x4, scoped, tag = 'scoped memory for tpu_custom_call.1']
    %8 = vsyncpa [#allocation3], 0
    // Predicated region
    $region2: #{tpu_custom_call.1} parent=1 // pred_check
      _
    $region3: #{tpu_custom_call.1} parent=1 // pred_check_branch
      %10 = sbr.rel (0) target = $region5
    $region4: #{tpu_custom_call.1} parent=1 // pred_region
      _
    $region5: #{tpu_custom_call.1} parent=1 // pred_fallthru
      _
    // Predicated region
    $region6: #{tpu_custom_call.1} parent=1 // pred_check
      _
    $region7: #{tpu_custom_call.1} parent=1 // pred_check_branch
      %12 = sbr.rel (0) target = $region9
    $region8: #{tpu_custom_call.1} parent=1 // pred_region
      _
    $region9: #{tpu_custom_call.1} parent=1 // pred_fallthru
      _
    // Predicated region
    $region10: #{tpu_custom_call.1} parent=1 // pred_check
      _
    $region11: #{tpu_custom_call.1} parent=1 // pred_check_branch
      %14 = sbr.rel (0) target = $region13
    $region12: #{tpu_custom_call.1} parent=1 // pred_region
      _
    $region13: #{tpu_custom_call.1} parent=1 // pred_fallthru
      _
    %v15 = vld [vmem:[%s0] sm:$0xff]
    %v16 = vld [vmem:[%s1] sm:$0xff]
    %v17 = vld [vmem:[%s1 + $0x8] sm:$0xff]
    %v18 = vld [vmem:[%s1 + $0x10] sm:$0xff]
    %v19 = vld [vmem:[%s1 + $0x18] sm:$0xff]
    %v20 = vld [vmem:[%s2] sm:$0x1]
    %v22 = vperm.slane %v20, 0
    %vm24 = vcmask 261120
    %v26 = vsel %vm24, %v15, 0
    %28 = vmatpush.msra.mxu0 0.0
    %29 = vmatpush.msra.mxu0 0.0
    %30 = vmatpush.msra.mxu0 0.0
    %31 = vmatpush.msra.mxu0 0.0
    %32 = vmatpush.msra.mxu0 0.0
    %33 = vmatpush.msra.mxu0 0.0
    %34 = vmatpush.msra.mxu0 0.0
    %35 = vmatpush.msra.mxu0 0.0
    %36 = vmatpush.msra.mxu0 0.0
    %37 = vmatpush.msra.mxu0 0.0
    %38 = vmatpush.msra.mxu0 0.0
    %39 = vmatpush.msra.mxu0 0.0
    %40 = vmatpush.msra.mxu0 %v19
    %41 = vmatpush.msra.mxu0 %v18
    %42 = vmatpush.msra.mxu0 %v17
    %43 = vmatpush.msra.mxu0 %v16
    %44 = vmatmul.f32.gmra.mxu0 %v26
    %v45 = vpop.f32.mrf.mxu0
    %v46 = vadd.f32 %v22, %v45
    %47 = vdwg.mxu0
    %v48 = vxor.u32 %v46, 2147483648
    %v49 = vmul.f32 %v48, 1.442695
    %v50 = vpow.pop %v49
    %v51 = vadd.f32 %v50, 1.0
    %v52 = vrcp.pop %v51
    %v53 = vmul.f32 %v51, %v52
    %v54 = vsub.f32 1.0, %v53
    %v55 = vmul.f32 %v52, %v54
    %v56 = vadd.f32 %v52, %v55
    %vm57 = vweird.f32 %v51
    %vm58 = vweird.f32 %v52
    %vm59 = vmor %vm57, %vm58
    %v60 = vsel %vm59, %v52, %v56
    %v61 = vand.u32 2147483647, %v51
    %vm62 = vcmp.eq.f32.partialorder %v61, 8.507059e+37
    %v63 = vand.u32 %v51, 2147483648
    %v64 = vor.u32 1.1754944e-38, %v63
    %v65 = vsel %vm62, %v64, %v60
    %v66 = vmul.f32 1.0, %v65
    %vm67 = vcmask 64512
    %68 = vst.msk [vmem:[#allocation2] sm:$0xff] %vm67, %v66
    // Predicated region
    $region14: #{tpu_custom_call.1} parent=1 // pred_check
      _
    $region15: #{tpu_custom_call.1} parent=1 // pred_check_branch
      %70 = sbr.rel (0) target = $region17
    $region16: #{tpu_custom_call.1} parent=1 // pred_region
      %72 = vsyncadd [#allocation3], 96
      %s73 = sshll.u32 [#allocation2], 4
      %s74 = int_to_ptr.vmem [resolvable:$true] %s73
      %s75 = sshll.u32 %s3, 4
      %s76 = int_to_ptr.hbm [resolvable:$true] %s75
      %81 = dma.vmem_to_hbm [thread:$0]  %s74, 32, %s76, [#allocation3], 32, 32, 2
    $region17: #{tpu_custom_call.1} parent=1 // pred_fallthru
      _
    // Predicated region
    $region18: #{tpu_custom_call.1} parent=1 // pred_check
      _
    $region19: #{tpu_custom_call.1} parent=1 // pred_check_branch
      %83 = sbr.rel (0) target = $region21
    $region20: #{tpu_custom_call.1} parent=1 // pred_region
      %85 = dma.done [#allocation3], 128
    $region21: #{tpu_custom_call.1} parent=1 // pred_fallthru
      _
    %86 = vsyncpa [#allocation3], 1

</llo_original>
